<compile_context>
chip_gen: v5e
topology: v5e:2x2
jax: 0.10.0
libtpu: 0.0.40
codegen_flags: <defaults>
</compile_context>

<pallas_src>
import functools

import jax
import jax.numpy as jnp
from jax.experimental import pallas as pl
from jax.experimental.pallas import tpu as pltpu


def _round_up(x, m):
    return ((x + m - 1) // m) * m


def _cdiv(a, b):
    return (a + b - 1) // b


def _conv1d_kernel(x_cur_ref, x_halo_ref, w_ref, b_ref, o_ref, *scratch,
                   K, stride, halo, tc, n_ct, tap_plan):
    """One (batch, W-tile, Cin-tile) grid step.

    x_cur_ref  : (1, S, tc, tw)   phase-split input, current W tile
    x_halo_ref : (1, S, tc, 128)  first 128-lane slab of the next tile (clamped)
    w_ref      : (n_ct, O, K*tc)  resident weight, (phase, tap, cin) packing
    b_ref      : (O, 1)           resident bias (f32)
    o_ref      : (1, O, tw)       output tile (NCW layout, W on lanes)
    scratch    : ()               when n_ct == 1
                 (acc_ref,)       (O, tw) f32 accumulator when n_ct > 1
    """
    c = pl.program_id(2)
    tw = o_ref.shape[2]

    # Weight slice for this Cin tile (resident in VMEM; one small load).
    w_c = w_ref[c] if n_ct > 1 else w_ref[0]          # (O, K*tc)

    psum = None
    off = 0
    for r in range(stride):
        qs = tap_plan[r]                              # static shifts, ascending
        n = len(qs)
        if n == 0:
            continue
        xa = x_cur_ref[0, r]                          # (tc, tw)
        if halo > 0:
            xb = x_halo_ref[0, r, :, :halo]           # (tc, halo)
            cat = jnp.concatenate([xa, xb], axis=-1)  # (tc, tw + halo)
        else:
            cat = xa
        if n == 1:
            rhs = cat[:, qs[0]:qs[0] + tw]            # (tc, tw)
        else:
            # Stack the shifted windows along the contraction dim -> one big
            # MXU dot per phase instead of n tiny ones.
            rhs = jnp.concatenate([cat[:, q:q + tw] for q in qs], axis=0)
        lhs = w_c[:, off * tc:(off + n) * tc]         # (O, n*tc), static slice
        contrib = jnp.dot(lhs, rhs, preferred_element_type=jnp.float32)
        psum = contrib if psum is None else psum + contrib
        off += n

    if not scratch:
        # Single Cin tile: no reduction -> fuse bias, write straight out.
        o_ref[0] = (psum + b_ref[...]).astype(o_ref.dtype)
    else:
        acc_ref, = scratch

        @pl.when(c == 0)
        def _init():
            # Fold the bias into the init (removes the finalize add).
            acc_ref[...] = jnp.broadcast_to(
                b_ref[...], acc_ref.shape).astype(jnp.float32)

        acc_ref[...] += psum

        @pl.when(c == pl.num_programs(2) - 1)
        def _finalize():
            o_ref[0] = acc_ref[...].astype(o_ref.dtype)


def conv1d_forward(x, weight, bias, stride=1, padding=0, *,
                   tw_target=None, tc_target=256, use_bf16=False):
    """Replicates Conv1dFunction.forward.

    x      : (B, C_in, W)   float32
    weight : (O, C_in, K)   float32
    bias   : (O,)           float32
    returns: (B, O, W_out)  x.dtype
    """
    B, Cin, W = x.shape
    O, _, K = weight.shape
    s, p = int(stride), int(padding)
    assert W + 2 * p - K >= 0, "kernel wider than padded input"
    W_out = (W + 2 * p - K) // s + 1
    halo = (K - 1) // s                       # extra output-lane columns needed
    assert halo <= 128, (
        "TODO(synk): taps spanning >128 output lanes need a wider halo slab")

    # ---- channel tiling (round to 8 sublanes, not to tc_target) ----------
    if Cin <= tc_target:
        tc, Cin_p, n_ct = Cin, Cin, 1
    else:
        Cin_8 = _round_up(Cin, 8)
        n_ct = _cdiv(Cin_8, tc_target)
        tc = _round_up(_cdiv(Cin_8, n_ct), 8)
        Cin_p = n_ct * tc
    O_p = _round_up(O, 8)

    # ---- generation-aware VMEM budget & lane-tile size --------------------
    try:
        info = pltpu.get_tpu_info()
        vmem_cap = int(getattr(info, "vmem_capacity_bytes", 64 * 1024 * 1024))
    except Exception:
        vmem_cap = 64 * 1024 * 1024           # conservative (v7x-sized)
    vmem_limit = min((vmem_cap * 3) // 4, 96 * 1024 * 1024)
    budget = (vmem_cap * 2) // 5              # ~40% of VMEM for tiles/buffers
    if tw_target is None:
        tw_target = 2048 if vmem_cap >= 96 * 1024 * 1024 else 1024

    in_item = 2 if use_bf16 else x.dtype.itemsize
    out_item = x.dtype.itemsize

    def _footprint(tw_):
        cur = 2 * s * tc * tw_ * in_item          # double-buffered current tile
        hal = 2 * s * tc * 128 * in_item          # double-buffered halo slab
        out = 2 * O_p * tw_ * out_item            # double-buffered output tile
        acc = (O_p * tw_ * 4) if n_ct > 1 else 0  # f32 accumulator
        wgt = n_ct * K * tc * O_p * in_item       # resident weight
        return cur + hal + out + acc + wgt + O_p * 4

    need = W_out + halo
    tw = min(tw_target, _round_up(need, 128))
    tw = max(128, (tw // 128) * 128)
    while tw > 128 and _footprint(tw) > budget:
        tw -= 128

    # ---- grid extents ------------------------------------------------------
    # W_x*s must also cover the padded input width so the phase-split reshape
    # never needs a negative right-pad (stride>1 edge case).
    W_x_needed = max(need, _cdiv(W + 2 * p, s))
    n_wt = _cdiv(W_x_needed, tw)
    W_x = n_wt * tw
    total_w = W_x * s
    tw_blk = tw // 128
    n_lane_blk = W_x // 128

    # ---- glue: single pad (+ phase-split transpose only when stride>1) ----
    x_pad = jnp.pad(x, ((0, 0), (0, Cin_p - Cin), (p, total_w - W - p)))
    if s == 1:
        x_ph = x_pad[:, None, :, :]                                # free reshape
    else:
        # TODO(synk): stride>1 phase-split transpose is one extra HBM pass.
        x_ph = x_pad.reshape(B, Cin_p, W_x, s).transpose(0, 3, 1, 2)

    # ---- weight packing: (n_ct, O_p, K*tc), column order = (phase, q asc) -
    tap_plan = tuple(tuple(k // s for k in range(r, K, s)) for r in range(s))
    w_p = jnp.pad(weight, ((0, O_p - O), (0, Cin_p - Cin), (0, 0)))
    tiles = []
    for t in range(n_ct):
        w_t = w_p[:, t * tc:(t + 1) * tc, :]                       # (O_p, tc, K)
        cols = [w_t[:, :, k] for r in range(s) for k in range(r, K, s)]
        tiles.append(jnp.concatenate(cols, axis=1))                # (O_p, K*tc)
    w_flat = jnp.stack(tiles, axis=0)                              # (n_ct,O_p,K*tc)
    b_r = jnp.pad(bias, (0, O_p - O)).reshape(O_p, 1).astype(jnp.float32)

    if use_bf16:
        x_ph = x_ph.astype(jnp.bfloat16)
        w_flat = w_flat.astype(jnp.bfloat16)

    kernel = functools.partial(_conv1d_kernel, K=K, stride=s, halo=halo,
                               tc=tc, n_ct=n_ct, tap_plan=tap_plan)
    scratch = [pltpu.VMEM((O_p, tw), jnp.float32)] if n_ct > 1 else []

    out_p = pl.pallas_call(
        kernel,
        out_shape=jax.ShapeDtypeStruct((B, O_p, W_x), x.dtype),
        grid_spec=pltpu.PrefetchScalarGridSpec(
            num_scalar_prefetch=0,
            grid=(B, n_wt, n_ct),
            in_specs=[
                # current W tile (phase-split input)
                pl.BlockSpec((1, s, tc, tw), lambda b, w, c: (b, 0, c, w)),
                # 128-lane halo slab: first slab of the next W tile (clamped;
                # clamp is safe — those output columns are >= W_out).
                pl.BlockSpec(
                    (1, s, tc, 128),
                    lambda b, w, c: (b, 0, c,
                                     jnp.minimum((w + 1) * tw_blk,
                                                 n_lane_blk - 1))),
                # resident weight + bias (constant index_map -> fetched once)
                pl.BlockSpec((n_ct, O_p, K * tc), lambda b, w, c: (0, 0, 0)),
                pl.BlockSpec((O_p, 1), lambda b, w, c: (0, 0)),
            ],
            out_specs=pl.BlockSpec((1, O_p, tw), lambda b, w, c: (b, 0, w)),
            scratch_shapes=scratch,
        ),
        compiler_params=pltpu.CompilerParams(
            dimension_semantics=("parallel", "parallel", "arbitrary"),
            vmem_limit_bytes=vmem_limit,
        ),
        cost_estimate=pl.CostEstimate(
            flops=2 * B * W_out * O * Cin * K,
            transcendentals=0,
            bytes_accessed=int(B * s * Cin_p * W_x * in_item * (1 + 128 / tw)
                               + n_ct * K * tc * O_p * in_item
                               + B * O_p * W_x * out_item),
        ),
    )(x_ph, x_ph, w_flat, b_r)

    # drop alignment padding (already exact NCW layout)
    return out_p[:, :O, :W_out]


def _reference_conv1d(x, weight, bias, stride, padding):
    x_pad = jnp.pad(x, ((0, 0), (0, 0), (padding, padding)))
    O, _, K = weight.shape
    W_out = (x.shape[2] + 2 * padding - K) // stride + 1
    idx = jnp.arange(W_out)[:, None] * stride + jnp.arange(K)[None, :]
    return jnp.einsum("bcik,ock->boi", x_pad[:, :, idx], weight) + bias[None, :, None]


if __name__ == "__main__":
    # Module config (mirrors Conv1d.__init__), small synthetic shapes.
    in_channels, out_channels, kernel_size = 4, 8, 3
    batch, width = 2, 16

    key = jax.random.PRNGKey(0)
    kx, kw = jax.random.split(key)
    x = jax.random.normal(kx, (batch, in_channels, width), dtype=jnp.float32)
    weight = jax.random.normal(
        kw, (out_channels, in_channels, kernel_size), dtype=jnp.float32)
    bias = jnp.zeros((out_channels,), dtype=jnp.float32)   # zeros, as in __init__

    fwd = jax.jit(conv1d_forward,
                  static_argnames=("stride", "padding", "tw_target",
                                   "tc_target", "use_bf16"))

    # stride=1, padding=1
    out = jax.block_until_ready(fwd(x, weight, bias, stride=1, padding=1))
    ref = _reference_conv1d(x, weight, bias, 1, 1)
    assert out.shape == ref.shape and out.dtype == jnp.float32
    assert jnp.allclose(out, ref, atol=1e-4, rtol=1e-4)

    # stride=2, padding=1 (exercises the phase-split strided path)
    out2 = jax.block_until_ready(fwd(x, weight, bias, stride=2, padding=1))
    ref2 = _reference_conv1d(x, weight, bias, 2, 1)
    assert out2.shape == ref2.shape
    assert jnp.allclose(out2, ref2, atol=1e-4, rtol=1e-4)

    # TODO(synk): Conv1dFunction.backward (custom grads) is not implemented —
    # forward-only kernel, as requested.
    print("KERNEL_OK")
</pallas_src>

<mosaic_0001>
module attributes {stable_mosaic.version = 11 : i64} {
  func.func @_conv1d_kernel(%arg0: i32, %arg1: i32, %arg2: i32, %arg3: memref<1x1x4x128xf32, #tpu.memory_space<vmem>>, %arg4: memref<1x1x4x128xf32, #tpu.memory_space<vmem>>, %arg5: memref<1x8x12xf32, #tpu.memory_space<vmem>>, %arg6: memref<8x1xf32, #tpu.memory_space<vmem>>, %arg7: memref<1x8x128xf32, #tpu.memory_space<vmem>>) attributes {dimension_semantics = [#tpu.dimension_semantics<parallel>, #tpu.dimension_semantics<parallel>, #tpu.dimension_semantics<arbitrary>], iteration_bounds = array<i64: 2, 1, 1>, scalar_prefetch = 0 : i64, scratch_operands = 0 : i64, tpu.core_type = #tpu.core_type<tc>, window_params = [{transform_indices = @transform_0, window_bounds = array<i64: 1, 1, 4, 128>}, {transform_indices = @transform_1, window_bounds = array<i64: 1, 1, 4, 128>}, {pipeline_mode = #tpu.pipeline_mode<synchronous>, transform_indices = @transform_2, window_bounds = array<i64: 1, 8, 12>}, {pipeline_mode = #tpu.pipeline_mode<synchronous>, transform_indices = @transform_3, window_bounds = array<i64: 8, 1>}, {transform_indices = @transform_4, window_bounds = array<i64: 1, 8, 128>}]} {
    %c0 = arith.constant 0 : index
    %c0_0 = arith.constant 0 : index
    %c0_1 = arith.constant 0 : index
    %0 = vector.load %arg5[%c0, %c0_0, %c0_1] : memref<1x8x12xf32, #tpu.memory_space<vmem>>, vector<1x8x12xf32>
    %1 = vector.shape_cast %0 : vector<1x8x12xf32> to vector<8x12xf32>
    %c0_2 = arith.constant 0 : index
    %c0_3 = arith.constant 0 : index
    %c0_4 = arith.constant 0 : index
    %c0_5 = arith.constant 0 : index
    %2 = vector.load %arg3[%c0_2, %c0_3, %c0_4, %c0_5] : memref<1x1x4x128xf32, #tpu.memory_space<vmem>>, vector<1x1x4x128xf32>
    %3 = vector.shape_cast %2 : vector<1x1x4x128xf32> to vector<4x128xf32>
    %c0_6 = arith.constant 0 : index
    %c0_7 = arith.constant 0 : index
    %c0_8 = arith.constant 0 : index
    %c0_9 = arith.constant 0 : index
    %4 = vector.load %arg4[%c0_6, %c0_7, %c0_8, %c0_9] : memref<1x1x4x128xf32, #tpu.memory_space<vmem>>, vector<1x1x4x2xf32>
    %5 = vector.shape_cast %4 : vector<1x1x4x2xf32> to vector<4x2xf32>
    %6 = tpu.concatenate %3, %5 in 1 : vector<4x128xf32>, vector<4x2xf32> -> vector<4x130xf32>
    %7 = vector.extract_strided_slice %6 {offsets = [0, 0], sizes = [4, 128], strides = [1, 1]} : vector<4x130xf32> to vector<4x128xf32>
    %8 = vector.extract_strided_slice %6 {offsets = [0, 1], sizes = [4, 128], strides = [1, 1]} : vector<4x130xf32> to vector<4x128xf32>
    %9 = vector.extract_strided_slice %6 {offsets = [0, 2], sizes = [4, 128], strides = [1, 1]} : vector<4x130xf32> to vector<4x128xf32>
    %10 = tpu.concatenate %7, %8, %9 in 0 : vector<4x128xf32>, vector<4x128xf32>, vector<4x128xf32> -> vector<12x128xf32>
    %cst = arith.constant dense<0.000000e+00> : vector<8x128xf32>
    %11 = tpu.matmul %1, %10, %cst {dimension_numbers = #tpu.dot_dimension_numbers<[1], [0], [0], [1], [0, 0, 1, 1], [], []>} : vector<8x12xf32>, vector<12x128xf32>, vector<8x128xf32> -> vector<8x128xf32>
    %c0_10 = arith.constant 0 : index
    %c0_11 = arith.constant 0 : index
    %12 = vector.load %arg6[%c0_10, %c0_11] : memref<8x1xf32, #tpu.memory_space<vmem>>, vector<8x1xf32>
    %13 = vector.broadcast %12 : vector<8x1xf32> to vector<8x128xf32>
    %14 = arith.addf %11, %13 : vector<8x128xf32>
    %c0_12 = arith.constant 0 : index
    %c0_13 = arith.constant 0 : index
    %c0_14 = arith.constant 0 : index
    %15 = vector.load %arg7[%c0_12, %c0_13, %c0_14] : memref<1x8x128xf32, #tpu.memory_space<vmem>>, vector<1x8x128xf32>
    %16 = vector.shape_cast %15 : vector<1x8x128xf32> to vector<8x128xf32>
    %17 = vector.shape_cast %14 : vector<8x128xf32> to vector<1x8x128xf32>
    tpu.vector_store %arg7[%c0_12, %c0_13, %c0_14], %17 {strides = array<i32>} : memref<1x8x128xf32, #tpu.memory_space<vmem>>, vector<1x8x128xf32>,
    return
  }
  func.func @transform_0(%arg0: i32, %arg1: i32, %arg2: i32) -> (i32, i32, i32, i32) {
    %c0_i32 = arith.constant 0 : i32
    %c0_i32_0 = arith.constant 0 : i32
    return %arg0, %c0_i32, %arg2, %arg1 : i32, i32, i32, i32
  }
  func.func @transform_1(%arg0: i32, %arg1: i32, %arg2: i32) -> (i32, i32, i32, i32) {
    %c1_i32 = arith.constant 1 : i32
    %0 = arith.addi %arg1, %c1_i32 : i32
    %c1_i32_0 = arith.constant 1 : i32
    %1 = arith.muli %0, %c1_i32_0 : i32
    %c0_i32 = arith.constant 0 : i32
    %2 = arith.minsi %1, %c0_i32 : i32
    %c0_i32_1 = arith.constant 0 : i32
    %c0_i32_2 = arith.constant 0 : i32
    return %arg0, %c0_i32_1, %arg2, %2 : i32, i32, i32, i32
  }
  func.func @transform_2(%arg0: i32, %arg1: i32, %arg2: i32) -> (i32, i32, i32) {
    %c0_i32 = arith.constant 0 : i32
    %c0_i32_0 = arith.constant 0 : i32
    %c0_i32_1 = arith.constant 0 : i32
    %c0_i32_2 = arith.constant 0 : i32
    return %c0_i32, %c0_i32_0, %c0_i32_1 : i32, i32, i32
  }
  func.func @transform_3(%arg0: i32, %arg1: i32, %arg2: i32) -> (i32, i32) {
    %c0_i32 = arith.constant 0 : i32
    %c0_i32_0 = arith.constant 0 : i32
    %c0_i32_1 = arith.constant 0 : i32
    return %c0_i32, %c0_i32_0 : i32, i32
  }
  func.func @transform_4(%arg0: i32, %arg1: i32, %arg2: i32) -> (i32, i32, i32) {
    %c0_i32 = arith.constant 0 : i32
    %c0_i32_0 = arith.constant 0 : i32
    return %arg0, %c0_i32, %arg1 : i32, i32, i32
  }
}

</mosaic_0001>

<llo_original>
// kernel: conv1d_forward.1
$region0: #{conv1d_forward.1}
  #allocation0 [shape = 'u32[]', space=smem, size = 0x4, offset = 0x4, fixed_abs, tag = 'smem constant byte address 0x4 - core index']
  #allocation1 [shape = 'u32[72,128]{1,0:T(1,128)}', space=vmem, size = 0x9000, scoped, tag = 'internal scratch']
  %s0 = inlined_call_operand.vmem [shape: f32[2,1,4,128], index: 0, kind: input, shape index: {}, may-alias: {0,1}]
  %s1 = inlined_call_operand.vmem [shape: f32[2,1,4,128], index: 1, kind: input, shape index: {}, may-alias: {0,1}]
  %s2 = inlined_call_operand.vmem [shape: f32[1,8,12], index: 2, kind: input, shape index: {}]
  %s3 = inlined_call_operand.vmem [shape: f32[8,1], index: 3, kind: input, shape index: {}]
  %s4 = inlined_call_operand.hbm [shape: f32[2,8,128], index: 4, kind: output, shape index: {}]
  %s5 = sld [smem:[#allocation0]]
  $region49: #{conv1d_forward.1} parent=0
    _
  %s7 = ssub.s32 1, %s5
  %s8 = scalar_select 0, %s7, %s5
  $region1: #{conv1d_forward.1} parent=0
    #allocation2 [shape = 'u8[8192]{0}', space=vmem, size = 0x2000, scoped, tag = 'output window, operand 0']
    #allocation3 [shape = 's32[2]{0}', space=sflag, size = 0x8, scoped, tag = 'scoped memory for conv1d_forward.1']
    %9 = vsyncpa [#allocation3], 0
    %s10 = scalar_lea.sflag [#allocation3], 1
    %11 = vsyncpa %s10, 0
    loop: start=0, step=1, limit=4
    $region2: #{conv1d_forward.1} parent=1 // loop_pre_header
      _
    $region3: #{conv1d_forward.1} parent=1 // loop_header
      %s13 = sphi 0, %s17
      %p14 = scmp.ge.s32.totalorder %s13, 4
      %s20 = sphi 0, %s39
      %s21 = sphi 0, %s35
      %s22 = sphi 0, %s31
      %s23 = sphi 0, %s20
      %s24 = sphi 0, %s21
      %s25 = sphi 0, %s22
      %s26 = sphi 0, %s23
      %s27 = sphi 0, %s24
      %s28 = sphi 0, %s25
      %s46 = sphi 0, %s48
      %s49 = sphi 0, %s46
      %s50 = sphi 0, %s49
      %s66 = sphi 0, %s50
      %s82 = sphi 0, %s84
      %s85 = sphi 0, %s82
      %s86 = sphi 0, %s85
      %s102 = sphi 0, %s86
      %s106 = sphi 0, %s106
      %s108 = sphi 0, %s106
      %s109 = sphi 0, %s108
      %s123 = sphi 0, %s109
      %s127 = sphi 0, %s127
      %s129 = sphi 0, %s127
      %s130 = sphi 0, %s129
      %s144 = sphi 0, %s130
      %s152 = sphi 0, %s154
      %s155 = sphi 0, %s152
      %s156 = sphi 0, %s155
      %s172 = sphi 0, %s156
    $region4: #{conv1d_forward.1} parent=1 // loop_header_branch
      %16 = sbr.rel (%p14) target = $region8
    $region5: #{conv1d_forward.1} parent=1 // loop_body
      %s18 = ssub.s32 %s13, 1
      %s19 = ssub.s32 %s13, 2
      %s29 = sadd.s32 1, %s22
      %p30 = scmp.ge.s32.totalorder %s29, 1
      %s31 = scalar_select %p30, 0, %s29
      %s32 = sadd.s32 1, %s21
      %s33 = scalar_select %p30, %s32, %s21
      %p34 = scmp.ge.s32.totalorder %s33, 1
      %s35 = scalar_select %p34, 0, %s33
      %s36 = sadd.s32 1, %s20
      %s37 = scalar_select %p34, %s36, %s20
      %p38 = scmp.ge.s32.totalorder %s37, 2
      %s39 = scalar_select %p38, 0, %s37
      %s40 = ssub.s32 %s20, %s39
      %s41 = ssub.s32 %s22, %s31
      %s42 = sor.u32 %s40, %s41
      %s43 = ssub.s32 %s21, %s35
      %s44 = sor.u32 %s42, %s43
      %p45 = scmp.eq.s32.totalorder %s44, 0
      %s47 = sadd.s32 %s46, 1
      %s48 = scalar_select %p45, %s46, %s47
      %p51 = pneg %p45
      %p52 = scmp.eq.s32.totalorder %s13, 1
      %p53 = por %p51, %p52
      %p54 = scmp.ne.s32.totalorder %s46, %s49
      %p55 = scmp.eq.s32.totalorder %s13, 0
      %p56 = por %p54, %p55
      %p57 = scmp.ne.s32.totalorder %s46, %s49
      %p58 = scmp.eq.s32.totalorder %s18, 1
      %p59 = por %p57, %p58
      %p60 = scmp.ne.s32.totalorder %s49, %s50
      %p61 = scmp.eq.s32.totalorder %s18, 0
      %p62 = por %p60, %p61
      %p63 = scmp.ne.s32.totalorder %s49, %s50
      %p64 = scmp.eq.s32.totalorder %s19, 1
      %p65 = por %p63, %p64
      %p67 = scmp.ne.s32.totalorder %s50, %s66
      %p68 = scmp.eq.s32.totalorder %s19, 0
      %p69 = por %p67, %p68
      %s70 = sadd.s32 %s21, 1
      %p71 = scmp.lt.s32.totalorder %s70, 0
      %s72 = scalar_select %p71, %s70, 0
      %s73 = sadd.s32 %s35, 1
      %p74 = scmp.lt.s32.totalorder %s73, 0
      %s75 = scalar_select %p74, %s73, 0
      %s76 = ssub.s32 %s20, %s39
      %s77 = ssub.s32 %s22, %s31
      %s78 = sor.u32 %s76, %s77
      %s79 = ssub.s32 %s72, %s75
      %s80 = sor.u32 %s78, %s79
      %p81 = scmp.eq.s32.totalorder %s80, 0
      %s83 = sadd.s32 %s82, 1
      %s84 = scalar_select %p81, %s82, %s83
      %p87 = pneg %p81
      %p88 = scmp.eq.s32.totalorder %s13, 1
      %p89 = por %p87, %p88
      %p90 = scmp.ne.s32.totalorder %s82, %s85
      %p91 = scmp.eq.s32.totalorder %s13, 0
      %p92 = por %p90, %p91
      %p93 = scmp.ne.s32.totalorder %s82, %s85
      %p94 = scmp.eq.s32.totalorder %s18, 1
      %p95 = por %p93, %p94
      %p96 = scmp.ne.s32.totalorder %s85, %s86
      %p97 = scmp.eq.s32.totalorder %s18, 0
      %p98 = por %p96, %p97
      %p99 = scmp.ne.s32.totalorder %s85, %s86
      %p100 = scmp.eq.s32.totalorder %s19, 1
      %p101 = por %p99, %p100
      %p103 = scmp.ne.s32.totalorder %s86, %s102
      %p104 = scmp.eq.s32.totalorder %s19, 0
      %p105 = por %p103, %p104
      %s107 = sadd.s32 %s106, 1
      %p110 = scmp.eq.s32.totalorder %s13, 1
      %p111 = scmp.ne.s32.totalorder %s106, %s108
      %p112 = scmp.eq.s32.totalorder %s13, 0
      %p113 = por %p111, %p112
      %p114 = scmp.ne.s32.totalorder %s106, %s108
      %p115 = scmp.eq.s32.totalorder %s18, 1
      %p116 = por %p114, %p115
      %p117 = scmp.ne.s32.totalorder %s108, %s109
      %p118 = scmp.eq.s32.totalorder %s18, 0
      %p119 = por %p117, %p118
      %p120 = scmp.ne.s32.totalorder %s108, %s109
      %p121 = scmp.eq.s32.totalorder %s19, 1
      %p122 = por %p120, %p121
      %p124 = scmp.ne.s32.totalorder %s109, %s123
      %p125 = scmp.eq.s32.totalorder %s19, 0
      %p126 = por %p124, %p125
      %s128 = sadd.s32 %s127, 1
      %p131 = scmp.eq.s32.totalorder %s13, 1
      %p132 = scmp.ne.s32.totalorder %s127, %s129
      %p133 = scmp.eq.s32.totalorder %s13, 0
      %p134 = por %p132, %p133
      %p135 = scmp.ne.s32.totalorder %s127, %s129
      %p136 = scmp.eq.s32.totalorder %s18, 1
      %p137 = por %p135, %p136
      %p138 = scmp.ne.s32.totalorder %s129, %s130
      %p139 = scmp.eq.s32.totalorder %s18, 0
      %p140 = por %p138, %p139
      %p141 = scmp.ne.s32.totalorder %s129, %s130
      %p142 = scmp.eq.s32.totalorder %s19, 1
      %p143 = por %p141, %p142
      %p145 = scmp.ne.s32.totalorder %s130, %s144
      %p146 = scmp.eq.s32.totalorder %s19, 0
      %p147 = por %p145, %p146
      %s148 = ssub.s32 %s20, %s39
      %s149 = ssub.s32 %s21, %s35
      %s150 = sor.u32 %s148, %s149
      %p151 = scmp.eq.s32.totalorder %s150, 0
      %s153 = sadd.s32 %s152, 1
      %s154 = scalar_select %p151, %s152, %s153
      %p157 = pneg %p151
      %p158 = scmp.eq.s32.totalorder %s13, 1
      %p159 = por %p157, %p158
      %p160 = scmp.ne.s32.totalorder %s152, %s155
      %p161 = scmp.eq.s32.totalorder %s13, 0
      %p162 = por %p160, %p161
      %p163 = scmp.ne.s32.totalorder %s152, %s155
      %p164 = scmp.eq.s32.totalorder %s18, 1
      %p165 = por %p163, %p164
      %p166 = scmp.ne.s32.totalorder %s155, %s156
      %p167 = scmp.eq.s32.totalorder %s18, 0
      %p168 = por %p166, %p167
      %p169 = scmp.ne.s32.totalorder %s155, %s156
      %p170 = scmp.eq.s32.totalorder %s19, 1
      %p171 = por %p169, %p170
      %p173 = scmp.ne.s32.totalorder %s156, %s172
      %p174 = scmp.eq.s32.totalorder %s19, 0
      %p175 = por %p173, %p174
      %p176 = scmp.le.s32.totalorder 1, %s13
      %p177 = scmp.lt.s32.totalorder %s13, 3
      %p178 = pnand %p176, %p177
      %p179 = pneg %p178
      // Predicated region
      $region9: #{conv1d_forward.1} parent=5 // pred_check
        _
      $region10: #{conv1d_forward.1} parent=5 // pred_check_branch
        %181 = sbr.rel (%p178) target = $region12
      $region11: #{conv1d_forward.1} parent=5 // pred_region
        %s182 = ssub.s32 %s13, 1
        // Predicated region
        $region13: #{conv1d_forward.1} parent=11 // pred_check
          %p183 = pneg %p119
        $region14: #{conv1d_forward.1} parent=11 // pred_check_branch
          %185 = sbr.rel (%p183) target = $region16
        $region15: #{conv1d_forward.1} parent=11 // pred_region
          _
        $region16: #{conv1d_forward.1} parent=11 // pred_fallthru
          _
        // Predicated region
        $region17: #{conv1d_forward.1} parent=11 // pred_check
          %p186 = pneg %p140
        $region18: #{conv1d_forward.1} parent=11 // pred_check_branch
          %188 = sbr.rel (%p186) target = $region20
        $region19: #{conv1d_forward.1} parent=11 // pred_region
          _
        $region20: #{conv1d_forward.1} parent=11 // pred_fallthru
          _
      $region12: #{conv1d_forward.1} parent=5 // pred_fallthru
        _
      %p189 = scmp.lt.s32.totalorder %s13, 2
      // Predicated region
      $region21: #{conv1d_forward.1} parent=5 // pred_check
        %p190 = pneg %p189
      $region22: #{conv1d_forward.1} parent=5 // pred_check_branch
        %192 = sbr.rel (%p190) target = $region24
      $region23: #{conv1d_forward.1} parent=5 // pred_region
        // Predicated region
        $region25: #{conv1d_forward.1} parent=23 // pred_check
          %p193 = pneg %p56
        $region26: #{conv1d_forward.1} parent=23 // pred_check_branch
          %195 = sbr.rel (%p193) target = $region28
        $region27: #{conv1d_forward.1} parent=23 // pred_region
          %p196 = scmp.lt.s32.totalorder %s20, 1
          %s197 = scalar_select %p196, %s20, 1
          %p198 = scmp.lt.s32.totalorder %s22, 0
          %s199 = scalar_select %p198, %s22, 0
          %p200 = scmp.lt.s32.totalorder %s21, 0
          %s201 = scalar_select %p200, %s21, 0
          %s202 = sadd.s32 %s201, %s199
          %s203 = sadd.s32 %s202, %s197
          %s204 = smul.addr %s203, 4
          %s205 = scalar_lea.vmem %s0, %s204
        $region28: #{conv1d_forward.1} parent=23 // pred_fallthru
          _
        // Predicated region
        $region29: #{conv1d_forward.1} parent=23 // pred_check
          %p206 = pneg %p92
        $region30: #{conv1d_forward.1} parent=23 // pred_check_branch
          %208 = sbr.rel (%p206) target = $region32
        $region31: #{conv1d_forward.1} parent=23 // pred_region
          %s209 = sadd.s32 %s21, 1
          %p210 = scmp.lt.s32.totalorder %s209, 0
          %s211 = scalar_select %p210, %s209, 0
          %p212 = scmp.lt.s32.totalorder %s20, 1
          %s213 = scalar_select %p212, %s20, 1
          %p214 = scmp.lt.s32.totalorder %s22, 0
          %s215 = scalar_select %p214, %s22, 0
          %p216 = scmp.lt.s32.totalorder %s211, 0
          %s217 = scalar_select %p216, %s211, 0
          %s218 = sadd.s32 %s217, %s215
          %s219 = sadd.s32 %s218, %s213
          %s220 = smul.addr %s219, 4
          %s221 = scalar_lea.vmem %s1, %s220
          %s222 = sadd.s32 %s21, 1
          %p223 = scmp.lt.s32.totalorder %s222, 0
          %s224 = scalar_select %p223, %s222, 0
        $region32: #{conv1d_forward.1} parent=23 // pred_fallthru
          _
      $region24: #{conv1d_forward.1} parent=5 // pred_fallthru
        _
      %p225 = scmp.le.s32.totalorder 1, %s13
      %p226 = scmp.lt.s32.totalorder %s13, 3
      %p227 = pnand %p225, %p226
      %p228 = pneg %p227
      // Predicated region
      $region33: #{conv1d_forward.1} parent=5 // pred_check
        _
      $region34: #{conv1d_forward.1} parent=5 // pred_check_branch
        %230 = sbr.rel (%p227) target = $region36
      $region35: #{conv1d_forward.1} parent=5 // pred_region
        %s231 = ssub.s32 %s13, 1
        %p232 = scmp.lt.s32.totalorder %s23, 1
        %s233 = scalar_select %p232, %s23, 1
        %p234 = scmp.lt.s32.totalorder %s25, 0
        %s235 = scalar_select %p234, %s25, 0
        %p236 = scmp.lt.s32.totalorder %s24, 0
        %s237 = scalar_select %p236, %s24, 0
        %s238 = sadd.s32 %s237, %s235
        %s239 = sadd.s32 %s238, %s233
        %s240 = smul.addr %s239, 4
        %s241 = scalar_lea.vmem %s0, %s240
        %p242 = pneg %p62
        %p243 = pneg %p59
        %s244 = sadd.s32 %s24, 1
        %p245 = scmp.lt.s32.totalorder %s244, 0
        %s246 = scalar_select %p245, %s244, 0
        %p247 = scmp.lt.s32.totalorder %s23, 1
        %s248 = scalar_select %p247, %s23, 1
        %p249 = scmp.lt.s32.totalorder %s25, 0
        %s250 = scalar_select %p249, %s25, 0
        %p251 = scmp.lt.s32.totalorder %s246, 0
        %s252 = scalar_select %p251, %s246, 0
        %s253 = sadd.s32 %s252, %s250
        %s254 = sadd.s32 %s253, %s248
        %s255 = smul.addr %s254, 4
        %s256 = scalar_lea.vmem %s1, %s255
        %p257 = pneg %p98
        %p258 = pneg %p95
        %p259 = pneg %p119
        %p260 = pneg %p116
        %p261 = pneg %p140
        %p262 = pneg %p137
        %p263 = pneg %p168
        %p264 = pneg %p165
        %s265 = sand.u32 %s155, 1
        %s266 = scalar_lea.sflag [#allocation3], %s265
        %s267 = sand.u32 %s155, 1
        %s268 = smul.addr %s267, 8
        %s269 = scalar_lea.vmem [#allocation2], %s268
        %p270 = scmp.lt.s32.totalorder %s23, 1
        %s271 = scalar_select %p270, %s23, 1
        %p272 = scmp.lt.s32.totalorder %s25, 0
        %s273 = scalar_select %p272, %s25, 0
        %p274 = scmp.lt.s32.totalorder %s24, 0
        %s275 = scalar_select %p274, %s24, 0
        %s276 = sadd.s32 %s275, %s273
        %s277 = sadd.s32 %s276, %s271
        %s278 = smul.addr %s277, 4
        %s279 = scalar_lea.vmem %s0, %s278
        %s280 = sadd.s32 %s24, 1
        %p281 = scmp.lt.s32.totalorder %s280, 0
        %s282 = scalar_select %p281, %s280, 0
        %p283 = scmp.lt.s32.totalorder %s23, 1
        %s284 = scalar_select %p283, %s23, 1
        %p285 = scmp.lt.s32.totalorder %s25, 0
        %s286 = scalar_select %p285, %s25, 0
        %p287 = scmp.lt.s32.totalorder %s282, 0
        %s288 = scalar_select %p287, %s282, 0
        %s289 = sadd.s32 %s288, %s286
        %s290 = sadd.s32 %s289, %s284
        %s291 = smul.addr %s290, 4
        %s292 = scalar_lea.vmem %s1, %s291
        %s293 = sadd.s32 %s24, 1
        %p294 = scmp.lt.s32.totalorder %s293, 0
        %s295 = scalar_select %p294, %s293, 0
        %v296 = vld [vmem:[%s2] sm:$0xff]
        %v297 = vld [vmem:[%s279] sm:$0xf]
        %v298 = vld [vmem:[%s292] sm:$0xf]
        %v301 = vrot.slane %v297, 4
        %v302 = vrot.slane %v298, 4
        %303 = vrot.lane.b32.xlu0 %v301, 127
        %v304 = vpop.permute.xlu0 %303
        %305 = vrot.lane.b32.xlu0 %v302, 127
        %v306 = vpop.permute.xlu0 %305
        %vm307 = vcmask 1039360
        %v308 = vsel %vm307, %v304, %v306
        %310 = vrot.lane.b32.xlu0 %v297, 126
        %v311 = vpop.permute.xlu0 %310
        %312 = vrot.lane.b32.xlu0 %v298, 126
        %v313 = vpop.permute.xlu0 %312
        %vm314 = vcmask 1031168
        %v315 = vsel %vm314, %v311, %v313
        %vm316 = vcmask 1043456
        %v317 = vsel %vm316, %v297, %v308
        %v318 = vld [vmem:[%s3] sm:$0xff]
        %320 = vset.pattern.permute.xlu0 0
        %321 = vperm.xlu0 %320, %v318
        %v322 = vpop.permute.xlu0 %321
        %vm324 = vcmask 97280
        %v326 = vsel %vm324, %v296, 0
        %v328 = vsel %vm316, %v315, 0
        %330 = vmatpush.msra.mxu0 0.0
        %331 = vmatpush.msra.mxu0 0.0
        %332 = vmatpush.msra.mxu0 0.0
        %333 = vmatpush.msra.mxu0 0.0
        %334 = vmatpush.msra.mxu0 0.0
        %335 = vmatpush.msra.mxu0 0.0
        %336 = vmatpush.msra.mxu0 0.0
        %337 = vmatpush.msra.mxu0 0.0
        %338 = vmatpush.msra.mxu0 0.0
        %339 = vmatpush.msra.mxu0 0.0
        %340 = vmatpush.msra.mxu0 0.0
        %341 = vmatpush.msra.mxu0 0.0
        %342 = vmatpush.msra.mxu0 0.0
        %343 = vmatpush.msra.mxu0 0.0
        %344 = vmatpush.msra.mxu0 %v328
        %345 = vmatpush.msra.mxu0 %v317
        %346 = vmatmul.f32.gmra.mxu0 %v326
        %v347 = vpop.f32.mrf.mxu0
        %v348 = vadd.f32 %v322, %v347
        %349 = vdwg.mxu0
        %350 = vst [vmem:[%s269] sm:$0xff] %v348
        %s351 = sand.u32 %s155, 1
        %s352 = scalar_lea.sflag [#allocation3], %s351
        %s353 = sand.u32 %s155, 1
        %s354 = smul.addr %s353, 8
        %s355 = scalar_lea.vmem [#allocation2], %s354
        // Predicated region
        $region37: #{conv1d_forward.1} parent=35 // pred_check
          %p356 = pneg %p165
        $region38: #{conv1d_forward.1} parent=35 // pred_check_branch
          %358 = sbr.rel (%p356) target = $region40
        $region39: #{conv1d_forward.1} parent=35 // pred_region
          %360 = vsyncadd %s352, 0
          %s361 = sadd.s32 %s24, %s23
          %s362 = smul.addr %s361, 8
          %s363 = scalar_lea.hbm %s4, %s362
          %s365 = sshll.u32 %s355, 4
          %s366 = int_to_ptr.vmem [resolvable:$true] %s365
          %s367 = sshll.u32 %s363, 4
          %s368 = int_to_ptr.hbm [resolvable:$true] %s367
          %370 = dma.vmem_to_hbm [thread:$0]  %s366, 128, %s368, %s352
        $region40: #{conv1d_forward.1} parent=35 // pred_fallthru
          _
      $region36: #{conv1d_forward.1} parent=5 // pred_fallthru
        _
      %p371 = scmp.le.s32.totalorder 2, %s13
      // Predicated region
      $region41: #{conv1d_forward.1} parent=5 // pred_check
        %p372 = pneg %p371
      $region42: #{conv1d_forward.1} parent=5 // pred_check_branch
        %374 = sbr.rel (%p372) target = $region44
      $region43: #{conv1d_forward.1} parent=5 // pred_region
        %s375 = ssub.s32 %s13, 2
        // Predicated region
        $region45: #{conv1d_forward.1} parent=43 // pred_check
          %p376 = pneg %p171
        $region46: #{conv1d_forward.1} parent=43 // pred_check_branch
          %378 = sbr.rel (%p376) target = $region48
        $region47: #{conv1d_forward.1} parent=43 // pred_region
          %s379 = sand.u32 %s156, 1
          %s380 = scalar_lea.sflag [#allocation3], %s379
          %s381 = sand.u32 %s156, 1
          %s382 = smul.addr %s381, 8
          %s383 = scalar_lea.vmem [#allocation2], %s382
          %385 = dma.done %s380, 128
        $region48: #{conv1d_forward.1} parent=43 // pred_fallthru
          _
      $region44: #{conv1d_forward.1} parent=5 // pred_fallthru
        _
    $region6: #{conv1d_forward.1} parent=1 // loop_footer
      %s17 = sadd.s32 1, %s13
    $region7: #{conv1d_forward.1} parent=1 // loop_footer_branch
      %12 = sbr.rel target = $region3
    $region8: #{conv1d_forward.1} parent=1 // loop_exit
      _
    %386 = vsyncpa [#allocation3], 1
    %s387 = scalar_lea.sflag [#allocation3], 1
    %388 = vsyncpa %s387, 1

</llo_original>
